<compile_context>
chip_gen: v5e
topology: v5e:2x2
jax: 0.10.0
libtpu: 0.0.40
codegen_flags: <defaults>
</compile_context>

<pallas_src>
import functools

import jax
import jax.numpy as jnp
from jax.experimental import pallas as pl
from jax.experimental.pallas import tpu as pltpu

_LANES = 128
_SMALL_INPUT_BYTES = 256 * 1024  # below this, XLA's fused broadcast-mul beats a pallas_call


@functools.lru_cache(maxsize=1)
def _chip_config():
    """Return (target_tile_bytes, vmem_limit_bytes, num_tensorcores) for the local TPU."""
    kind = ""
    try:
        kind = jax.devices()[0].device_kind.lower()
    except Exception:
        pass
    if "v7" in kind:
        # ~3.2 TB/s per TC: larger tiles keep the per-step overhead <10%.
        # 4 buffers x 6 MiB = 24 MiB; raise scoped VMEM (64 MiB physical) for headroom.
        return 6 * 1024 * 1024, 48 * 1024 * 1024, 2
    if "v6" in kind:
        # 4 buffers x 4 MiB = 16 MiB < 32 MiB default scoped VMEM -> no limit override.
        return 4 * 1024 * 1024, None, 1
    if "v5e" in kind or "v5 lite" in kind or "v5lite" in kind:
        # 16 MiB default scoped VMEM; at ~0.8 TB/s HBM, 2 MiB tiles already hide the overhead.
        return 2 * 1024 * 1024, None, 1
    # Unknown / older generations: conservative default.
    return 2 * 1024 * 1024, None, 1


def _sublane_multiple(dtype):
    # sub-32-bit dtypes pack along sublanes: f32 -> 8 rows/vreg, bf16 -> 16, int8/fp8 -> 32
    itemsize = jnp.dtype(dtype).itemsize
    return max(8, 32 // max(itemsize, 1))


def _scale_kernel(s_ref, x_ref, o_ref):
    # s_ref: (1,) float32 scalar in SMEM; x_ref / o_ref: (tile_rows, 128) VMEM tiles.
    # Multiply against the fp32 scalar (promotes), cast the product (not the scalar).
    o_ref[...] = (x_ref[...] * s_ref[0]).astype(o_ref.dtype)


def scale_forward(x, scale, *, min_pallas_bytes=_SMALL_INPUT_BYTES, donate_x=False):
    """Apply y = x * scale where `scale` is a shape-(1,) float32 learnable parameter."""
    orig_shape = x.shape
    orig_dtype = x.dtype
    itemsize = jnp.dtype(orig_dtype).itemsize
    n = x.size
    scale_f32 = scale.astype(jnp.float32)

    def _plain(v):
        # Matches the kernel contract: fp32 multiply, result cast back to the input dtype.
        return (v.astype(jnp.float32) * scale_f32[0]).astype(orig_dtype)

    # Fast path 1: tiny tensors — the fixed pallas_call / single-grid-step cost dominates.
    if n * itemsize < min_pallas_bytes:
        return _plain(x)

    # Fast path 2: ragged (non-128-aligned) element counts — a standalone pad + kernel +
    # slice would cost ~3x the minimal 2*n*itemsize HBM traffic, while XLA's fused
    # broadcast-multiply is already at the HBM roofline for this trivially fusible op.
    if n % _LANES != 0:
        return _plain(x)

    rows = n // _LANES
    x2d = x.reshape(rows, _LANES)  # free bitcast for contiguous, lane-aligned inputs

    target_tile_bytes, vmem_limit, num_tc = _chip_config()
    packing = _sublane_multiple(orig_dtype)

    # Generation-aware large tiles, rounded to the dtype's sublane packing.
    tile_rows = target_tile_bytes // (_LANES * itemsize)
    tile_rows = max(packing, (tile_rows // packing) * packing)

    # On multi-TensorCore chips (v7x) keep the grid >= 2*num_tc so the "parallel"
    # grid axis shards evenly across cores for medium-sized inputs.
    if num_tc > 1 and rows >= 2 * num_tc * packing:
        cap = max(packing, ((rows // (2 * num_tc)) // packing) * packing)
        tile_rows = min(tile_rows, cap)

    if tile_rows >= rows:
        tile_rows = rows  # full-extent block is always a legal block shape
    grid = (pl.cdiv(rows, tile_rows),)  # ragged last row-block: Pallas masks edge writes

    out2d = pl.pallas_call(
        _scale_kernel,
        out_shape=jax.ShapeDtypeStruct((rows, _LANES), orig_dtype),
        grid_spec=pltpu.PrefetchScalarGridSpec(
            num_scalar_prefetch=0,
            grid=grid,
            in_specs=[
                pl.BlockSpec(memory_space=pltpu.MemorySpace.SMEM),  # fp32 scalar
                pl.BlockSpec((tile_rows, _LANES), lambda i: (i, 0)),
            ],
            out_specs=pl.BlockSpec((tile_rows, _LANES), lambda i: (i, 0)),
        ),
        compiler_params=pltpu.CompilerParams(
            dimension_semantics=("parallel",),  # lets v7x split the grid across its 2 TCs
            vmem_limit_bytes=vmem_limit,
        ),
        cost_estimate=pl.CostEstimate(
            flops=rows * _LANES,
            transcendentals=0,
            bytes_accessed=2 * rows * _LANES * itemsize,
        ),
        # Optional donation: halves peak HBM footprint when the caller can give up x.
        input_output_aliases=({1: 0} if donate_x else {}),
    )(scale_f32, x2d)

    return out2d.reshape(orig_shape)


class ScalePallas:
    """Learnable scale layer (Pallas TPU). Mirrors nncore Scale."""

    def __init__(self, init_value=1.0):
        # nn.Parameter(torch.Tensor([init_value])) -> shape (1,) float32
        self._scale = jnp.array([init_value], dtype=jnp.float32)

    def __call__(self, x):
        return scale_forward(x, self._scale)


if __name__ == "__main__":
    key = jax.random.PRNGKey(0)
    module = ScalePallas(init_value=1.5)  # deterministic init

    # Primary small NCHW input — forced through the Pallas kernel (threshold 0).
    x = jax.random.normal(key, (2, 4, 16, 16), dtype=jnp.float32)
    y = jax.block_until_ready(scale_forward(x, module._scale, min_pallas_bytes=0))
    ref = x * module._scale
    assert y.shape == x.shape and y.dtype == x.dtype
    assert jnp.allclose(y, ref, rtol=1e-6, atol=1e-6)

    # Same shape, bf16: exercises the dtype-aware tiling + fp32-multiply-then-cast path.
    x_bf = jax.random.normal(key, (2, 4, 16, 16), dtype=jnp.bfloat16)
    y_bf = jax.block_until_ready(scale_forward(x_bf, module._scale, min_pallas_bytes=0))
    ref_bf = (x_bf.astype(jnp.float32) * module._scale[0]).astype(jnp.bfloat16)
    assert y_bf.dtype == jnp.bfloat16 and jnp.allclose(
        y_bf.astype(jnp.float32), ref_bf.astype(jnp.float32), rtol=1e-2, atol=1e-2
    )

    # Larger lane-aligned input (1 MiB): takes the Pallas path under default thresholds.
    k1, k2 = jax.random.split(key)
    x_big = jax.random.normal(k1, (4, 8, 64, 128), dtype=jnp.float32)
    y_big = jax.block_until_ready(module(x_big))
    assert jnp.allclose(y_big, x_big * module._scale, rtol=1e-6, atol=1e-6)

    # Ragged / tiny input: plain-JAX fallback path (avoids pad+slice extra HBM traffic).
    x_r = jax.random.normal(k2, (3, 5, 8, 16), dtype=jnp.float32)
    y_r = jax.block_until_ready(module(x_r))
    assert jnp.allclose(y_r, x_r * module._scale, rtol=1e-6, atol=1e-6)

    print("KERNEL_OK")
</pallas_src>

<mosaic_0001>
module attributes {stable_mosaic.version = 11 : i64} {
  func.func @_scale_kernel(%arg0: i32, %arg1: memref<1xf32, #tpu.memory_space<smem>>, %arg2: memref<16x128xf32, #tpu.memory_space<vmem>>, %arg3: memref<16x128xf32, #tpu.memory_space<vmem>>) attributes {dimension_semantics = [#tpu.dimension_semantics<parallel>], iteration_bounds = array<i64: 1>, scalar_prefetch = 0 : i64, scratch_operands = 0 : i64, tpu.core_type = #tpu.core_type<tc>, window_params = [{transform_indices = @transform_0, window_bounds = array<i64: 1>}, {transform_indices = @transform_1, window_bounds = array<i64: 16, 128>}, {transform_indices = @transform_2, window_bounds = array<i64: 16, 128>}]} {
    %c0 = arith.constant 0 : index
    %c0_0 = arith.constant 0 : index
    %0 = vector.load %arg2[%c0, %c0_0] : memref<16x128xf32, #tpu.memory_space<vmem>>, vector<16x128xf32>
    %c0_1 = arith.constant 0 : index
    %1 = memref.load %arg1[%c0_1] : memref<1xf32, #tpu.memory_space<smem>>
    %2 = vector.broadcast %1 : f32 to vector<16x128xf32>
    %3 = arith.mulf %0, %2 : vector<16x128xf32>
    %c0_2 = arith.constant 0 : index
    %c0_3 = arith.constant 0 : index
    %4 = vector.load %arg3[%c0_2, %c0_3] : memref<16x128xf32, #tpu.memory_space<vmem>>, vector<16x128xf32>
    tpu.vector_store %arg3[%c0_2, %c0_3], %3 {strides = array<i32>} : memref<16x128xf32, #tpu.memory_space<vmem>>, vector<16x128xf32>,
    return
  }
  func.func @transform_0(%arg0: i32) -> i32 {
    %c0_i32 = arith.constant 0 : i32
    %c0_i32_0 = arith.constant 0 : i32
    return %c0_i32 : i32
  }
  func.func @transform_1(%arg0: i32) -> (i32, i32) {
    %c0_i32 = arith.constant 0 : i32
    %c0_i32_0 = arith.constant 0 : i32
    return %arg0, %c0_i32 : i32, i32
  }
  func.func @transform_2(%arg0: i32) -> (i32, i32) {
    %c0_i32 = arith.constant 0 : i32
    %c0_i32_0 = arith.constant 0 : i32
    return %arg0, %c0_i32 : i32, i32
  }
}

</mosaic_0001>

<llo_original>
// kernel: tpu_custom_call.1
$region0: #{tpu_custom_call.1}
  #allocation0 [shape = 'u32[]', space=smem, size = 0x4, offset = 0x4, fixed_abs, tag = 'smem constant byte address 0x4 - core index']
  #allocation1 [shape = 'u32[72,128]{1,0:T(1,128)}', space=vmem, size = 0x9000, scoped, tag = 'internal scratch']
  #allocation2 [shape = 'f32[1]{0:T(128)S(6)}', space=smem, size = 0x200, scoped, tag = 'scoped memory for tpu_custom_call.1']
  %s0 = inlined_call_operand.<no memory space> [shape: f32[1], index: 0, kind: input, shape index: {}]
  %s1 = inlined_call_operand.hbm [shape: f32[16,128], index: 1, kind: input, shape index: {}]
  %s2 = inlined_call_operand.hbm [shape: f32[16,128], index: 2, kind: output, shape index: {}]
  %s3 = sld [smem:[#allocation0]]
  $region22: #{tpu_custom_call.1} parent=0
    _
  %s5 = ssub.s32 1, %s3
  %s6 = scalar_select 0, %s5, %s3
  %7 = sst [smem:[#allocation2]] %s0
  $region1: #{tpu_custom_call.1} parent=0
    #allocation3 [shape = 'u8[8192]{0}', space=vmem, size = 0x2000, scoped, tag = 'input window, operand 1, single buffered']
    #allocation4 [shape = 's32[1]{0}', space=sflag, size = 0x4, scoped, tag = 'scoped memory for tpu_custom_call.1']
    #allocation5 [shape = 's32[1]{0}', space=sflag, size = 0x4, scoped, tag = 'scoped memory for tpu_custom_call.1']
    #allocation6 [shape = 'u8[8192]{0}', space=vmem, size = 0x2000, scoped, tag = 'output window, operand 0, single buffered']
    %8 = vsyncpa [#allocation4], 0
    %9 = vsyncpa [#allocation5], 0
    // Predicated region
    $region2: #{tpu_custom_call.1} parent=1 // pred_check
      _
    $region3: #{tpu_custom_call.1} parent=1 // pred_check_branch
      %11 = sbr.rel (0) target = $region5
    $region4: #{tpu_custom_call.1} parent=1 // pred_region
      _
    $region5: #{tpu_custom_call.1} parent=1 // pred_fallthru
      _
    // Predicated region
    $region6: #{tpu_custom_call.1} parent=1 // pred_check
      _
    $region7: #{tpu_custom_call.1} parent=1 // pred_check_branch
      %13 = sbr.rel (0) target = $region9
    $region8: #{tpu_custom_call.1} parent=1 // pred_region
      %15 = vsyncadd [#allocation4], 0
      %s16 = sshll.u32 %s1, 4
      %s17 = int_to_ptr.hbm [resolvable:$true] %s16
      %s18 = sshll.u32 [#allocation3], 4
      %s19 = int_to_ptr.vmem [resolvable:$true] %s18
      %24 = dma.hbm_to_vmem [thread:$0]  %s17, 256, %s19, [#allocation4], 128, 128, 8
    $region9: #{tpu_custom_call.1} parent=1 // pred_fallthru
      _
    // Predicated region
    $region10: #{tpu_custom_call.1} parent=1 // pred_check
      _
    $region11: #{tpu_custom_call.1} parent=1 // pred_check_branch
      %26 = sbr.rel (0) target = $region13
    $region12: #{tpu_custom_call.1} parent=1 // pred_region
      %28 = dma.done [#allocation4], 256
    $region13: #{tpu_custom_call.1} parent=1 // pred_fallthru
      _
    %v29 = vld [vmem:[#allocation3] sm:$0xff]
    %v30 = vld [vmem:[#allocation3 + $0x8] sm:$0xff]
    %s31 = sld [smem:[#allocation2]]
    %v32 = vstv %s31
    %v33 = vmul.f32 %v29, %v32
    %v34 = vmul.f32 %v30, %v32
    %35 = vst [vmem:[#allocation6] sm:$0xff] %v33
    %36 = vst [vmem:[#allocation6 + $0x8] sm:$0xff] %v34
    // Predicated region
    $region14: #{tpu_custom_call.1} parent=1 // pred_check
      _
    $region15: #{tpu_custom_call.1} parent=1 // pred_check_branch
      %38 = sbr.rel (0) target = $region17
    $region16: #{tpu_custom_call.1} parent=1 // pred_region
      %40 = vsyncadd [#allocation5], 0
      %s41 = sshll.u32 [#allocation6], 4
      %s42 = int_to_ptr.vmem [resolvable:$true] %s41
      %s43 = sshll.u32 %s2, 4
      %s44 = int_to_ptr.hbm [resolvable:$true] %s43
      %49 = dma.vmem_to_hbm [thread:$0]  %s42, 256, %s44, [#allocation5], 128, 128, 8
    $region17: #{tpu_custom_call.1} parent=1 // pred_fallthru
      _
    // Predicated region
    $region18: #{tpu_custom_call.1} parent=1 // pred_check
      _
    $region19: #{tpu_custom_call.1} parent=1 // pred_check_branch
      %51 = sbr.rel (0) target = $region21
    $region20: #{tpu_custom_call.1} parent=1 // pred_region
      %53 = dma.done [#allocation5], 256
    $region21: #{tpu_custom_call.1} parent=1 // pred_fallthru
      _
    %54 = vsyncpa [#allocation4], 1
    %55 = vsyncpa [#allocation5], 1

</llo_original>
